<compile_context>
chip_gen: v7x
topology: tpu7x:2x2x1
jax: 0.10.0
libtpu: 0.0.40
codegen_flags: <defaults>
</compile_context>

<pallas_src>
import jax
import jax.numpy as jnp
from jax.experimental import pallas as pl
from jax.experimental.pallas import tpu as pltpu

BATCH_PAD = 8   # pad batch to one full sublane group


def _gru_wavefront_kernel(
    x_ref,       # (T*Bp, F)      f32   time-major rows: row t*Bp + b == x[b, t, :]
    wih0_ref,    # (F, 8H)        f32   layer-0 input weights at blocks 0(r) / 2(z) / 4(n)
    wcomb_ref,   # (2H, 8H)       bf16  combined wavefront weight (see prepare_params)
    bcomb_ref,   # (1, 8H)        f32   all biases, per-block layout matching wcomb
    wlin_ref,    # (1, H)         f32   linear head weights
    blin_ref,    # (1, 1)         f32   linear head bias
    out_ref,     # (Bp, 128)      f32   lane-dense output block (col 0 is the result)
    gi_scr,      # ((T+1)*Bp, 8H) f32   hoisted layer-0 input projection (slot T = zeros)
):
    H = wlin_ref.shape[1]
    Bp = out_ref.shape[0]
    T = x_ref.shape[0] // Bp
    G8 = wcomb_ref.shape[1]          # 8 * H

    # ---- Hoisted layer-0 input projection for all timesteps (one matmul, off the ----
    # ---- per-wave serial chain).  Slot T stays zero (consumed by the last wave).  ----
    gi_scr[0:T * Bp, :] = jnp.dot(
        x_ref[...], wih0_ref[...], preferred_element_type=jnp.float32)
    gi_scr[T * Bp:(T + 1) * Bp, :] = jnp.zeros((Bp, G8), jnp.float32)

    # Broadcast biases once; combined weight is ~8 vregs -> trivially resident.
    bcomb = jnp.broadcast_to(bcomb_ref[...], (Bp, G8))
    wcomb = wcomb_ref[...]           # bf16 (2H, 8H)

    # ---- Prologue: layer-0 step 0 from zero initial state (no matmul needed). ----
    g = gi_scr[0:Bp, :] + bcomb
    r0 = jax.nn.sigmoid(g[:, 0 * H:1 * H])
    z0 = jax.nn.sigmoid(g[:, 2 * H:3 * H])
    n0 = jnp.tanh(g[:, 4 * H:5 * H] + r0 * g[:, 6 * H:7 * H])
    h1 = (1.0 - z0) * n0                                         # h1(0), since h1(-1)=0
    hpair = jnp.concatenate(                                      # [h1(0) | h2(-1)=0]
        [h1, jnp.zeros((Bp, H), jnp.float32)], axis=-1)

    # ---- Wavefront recurrence: ONE matmul + ONE sigmoid + ONE tanh per wave.      ----
    # Wave w consumes hpair = [h1(w) | h2(w-1)] and produces [h1(w+1) | h2(w)].
    # Column blocks of G: 0 L0r | 1 L1r | 2 L0z | 3 L1z | 4 L0n_i | 5 L1n_i | 6 L0n_h | 7 L1n_h
    # TODO(synk): weight-stationary MXU driving (pltpu.matmul_push_rhs/acc/pop) would
    #             avoid re-pushing the constant 32 KiB RHS every wave.
    for w in range(T):
        G = (jnp.dot(hpair.astype(jnp.bfloat16), wcomb,
                     preferred_element_type=jnp.float32)
             + gi_scr[(w + 1) * Bp:(w + 2) * Bp, :] + bcomb)
        rz = jax.nn.sigmoid(G[:, 0:4 * H])            # [r0 | r1 | z0 | z1]  (one EUP issue)
        r_pair = rz[:, 0:2 * H]
        z_pair = rz[:, 2 * H:4 * H]
        n_pair = jnp.tanh(G[:, 4 * H:6 * H] + r_pair * G[:, 6 * H:8 * H])   # [n0 | n1]
        hpair = (1.0 - z_pair) * n_pair + z_pair * hpair

        # TODO(synk): inter-layer dropout (p=0.3) omitted — eval-mode semantics.

    # hpair = [h1(T) (never used) | h2(T-1)].  Linear head on VPU + lane reduction.
    h2 = hpair[:, H:2 * H]
    y = jnp.sum(h2 * wlin_ref[...], axis=-1, keepdims=True) + blin_ref[...]   # (Bp, 1)
    out_ref[...] = jnp.broadcast_to(y, out_ref.shape)                          # lane-dense store


def gru_regressor_forward(x, kp):
    """x: (B, T, F) float32 -> (B, 1) float32. Assumes B <= BATCH_PAD."""
    B, T, F = x.shape
    Bp = BATCH_PAD
    assert B <= Bp, "TODO(synk): add a batch grid axis (parallel) for large B"
    G8 = kp["wcomb"].shape[1]

    # Time-major, batch padded to 8: row t*Bp + b holds x[b, t, :] (zeros for b >= B).
    xt = jnp.transpose(x, (1, 0, 2))                       # (T, B, F)
    xt = jnp.pad(xt, ((0, 0), (0, Bp - B), (0, 0)))        # (T, Bp, F)
    x_flat = xt.reshape(T * Bp, F)

    vmem = pl.BlockSpec(memory_space=pltpu.MemorySpace.VMEM)
    args = (x_flat, kp["wih0_p"], kp["wcomb"], kp["bcomb"], kp["wlin_row"], kp["blin"])

    out = pl.pallas_call(
        _gru_wavefront_kernel,
        out_shape=jax.ShapeDtypeStruct((Bp, 128), jnp.float32),
        in_specs=[vmem] * len(args),
        out_specs=vmem,
        scratch_shapes=[pltpu.VMEM(((T + 1) * Bp, G8), jnp.float32)],
    )(*args)
    return out[:B, :1]


def init_params(key, features=2, hidden=32):
    """PyTorch-layout params, U(-1/sqrt(H), 1/sqrt(H)) like nn.GRU / nn.Linear."""
    bound = 1.0 / jnp.sqrt(jnp.float32(hidden))
    keys = jax.random.split(key, 10)

    def u(kk, shape):
        return jax.random.uniform(kk, shape, jnp.float32, -bound, bound)

    return {
        "wih0": u(keys[0], (3 * hidden, features)),   # weight_ih_l0
        "whh0": u(keys[1], (3 * hidden, hidden)),     # weight_hh_l0
        "bih0": u(keys[2], (3 * hidden,)),
        "bhh0": u(keys[3], (3 * hidden,)),
        "wih1": u(keys[4], (3 * hidden, hidden)),     # weight_ih_l1
        "whh1": u(keys[5], (3 * hidden, hidden)),     # weight_hh_l1
        "bih1": u(keys[6], (3 * hidden,)),
        "bhh1": u(keys[7], (3 * hidden,)),
        "wlin": u(keys[8], (1, hidden)),              # linear.weight
        "blin": u(keys[9], (1,)),                     # linear.bias
    }


def prepare_params(p):
    """Fuse PyTorch-layout params into the wavefront-kernel layout.

    Combined weight wcomb (2H, 8H): rows [0,H) multiply h1(t), rows [H,2H) multiply h2(t-1).
    Column blocks (H lanes each):
      0: L0 r (Whh0)   1: L1 r (Wih1 / Whh1)   2: L0 z (Whh0)   3: L1 z (Wih1 / Whh1)
      4: L0 n_i (zero; comes from the hoisted input projection)
      5: L1 n_i (Wih1) 6: L0 n_h (Whh0)        7: L1 n_h (Whh1)
    """
    H = p["whh0"].shape[1]
    F = p["wih0"].shape[1]
    G8 = 8 * H
    wih0, whh0 = p["wih0"], p["whh0"]
    wih1, whh1 = p["wih1"], p["whh1"]
    bih0, bhh0, bih1, bhh1 = p["bih0"], p["bhh0"], p["bih1"], p["bhh1"]

    def gate(w, g):   # gate slice (r=0, z=1, n=2), transposed to (in_dim, H)
        return w[g * H:(g + 1) * H, :].T

    # Layer-0 input projection weight: x @ wih0_p lands gi contributions at blocks 0/2/4.
    wih0_p = jnp.zeros((F, G8), jnp.float32)
    wih0_p = wih0_p.at[:, 0 * H:1 * H].set(gate(wih0, 0))
    wih0_p = wih0_p.at[:, 2 * H:3 * H].set(gate(wih0, 1))
    wih0_p = wih0_p.at[:, 4 * H:5 * H].set(gate(wih0, 2))

    wcomb = jnp.zeros((2 * H, G8), jnp.float32)
    # rows [0,H): h1(t) contributions
    wcomb = wcomb.at[0:H, 0 * H:1 * H].set(gate(whh0, 0))     # L0 r
    wcomb = wcomb.at[0:H, 1 * H:2 * H].set(gate(wih1, 0))     # L1 r (input half)
    wcomb = wcomb.at[0:H, 2 * H:3 * H].set(gate(whh0, 1))     # L0 z
    wcomb = wcomb.at[0:H, 3 * H:4 * H].set(gate(wih1, 1))     # L1 z (input half)
    wcomb = wcomb.at[0:H, 5 * H:6 * H].set(gate(wih1, 2))     # L1 n_i
    wcomb = wcomb.at[0:H, 6 * H:7 * H].set(gate(whh0, 2))     # L0 n_h
    # rows [H,2H): h2(t-1) contributions
    wcomb = wcomb.at[H:2 * H, 1 * H:2 * H].set(gate(whh1, 0))  # L1 r (hidden half)
    wcomb = wcomb.at[H:2 * H, 3 * H:4 * H].set(gate(whh1, 1))  # L1 z (hidden half)
    wcomb = wcomb.at[H:2 * H, 7 * H:8 * H].set(gate(whh1, 2))  # L1 n_h

    bcomb = jnp.zeros((1, G8), jnp.float32)
    bcomb = bcomb.at[0, 0 * H:1 * H].set(bih0[0:H] + bhh0[0:H])            # L0 r
    bcomb = bcomb.at[0, 1 * H:2 * H].set(bih1[0:H] + bhh1[0:H])            # L1 r
    bcomb = bcomb.at[0, 2 * H:3 * H].set(bih0[H:2 * H] + bhh0[H:2 * H])    # L0 z
    bcomb = bcomb.at[0, 3 * H:4 * H].set(bih1[H:2 * H] + bhh1[H:2 * H])    # L1 z
    bcomb = bcomb.at[0, 4 * H:5 * H].set(bih0[2 * H:3 * H])                # L0 n_i
    bcomb = bcomb.at[0, 5 * H:6 * H].set(bih1[2 * H:3 * H])                # L1 n_i
    bcomb = bcomb.at[0, 6 * H:7 * H].set(bhh0[2 * H:3 * H])                # L0 n_h
    bcomb = bcomb.at[0, 7 * H:8 * H].set(bhh1[2 * H:3 * H])                # L1 n_h

    return {
        "wih0_p": wih0_p,                              # f32: one off-path projection
        "wcomb": wcomb.astype(jnp.bfloat16),           # bf16: serial-path MXU operand
        "bcomb": bcomb,
        "wlin_row": p["wlin"].astype(jnp.float32),     # (1, H)
        "blin": p["blin"].reshape(1, 1).astype(jnp.float32),
    }


def gru_regressor_reference(x, p):
    """Pure-JAX f32 reference with PyTorch GRU eval semantics."""
    B, T, _ = x.shape
    H = p["whh0"].shape[1]

    def cell(xt, h, wih, whh, bih, bhh):
        gi = xt @ wih.T + bih
        gh = h @ whh.T + bhh
        i_r, i_z, i_n = jnp.split(gi, 3, axis=-1)
        h_r, h_z, h_n = jnp.split(gh, 3, axis=-1)
        r = jax.nn.sigmoid(i_r + h_r)
        z = jax.nn.sigmoid(i_z + h_z)
        n = jnp.tanh(i_n + r * h_n)
        return (1.0 - z) * n + z * h

    h1 = jnp.zeros((B, H), jnp.float32)
    h2 = jnp.zeros((B, H), jnp.float32)
    for t in range(T):
        h1 = cell(x[:, t, :], h1, p["wih0"], p["whh0"], p["bih0"], p["bhh0"])
        h2 = cell(h1, h2, p["wih1"], p["whh1"], p["bih1"], p["bhh1"])
    return h2 @ p["wlin"].T + p["blin"]


if __name__ == "__main__":
    B, T, F, H = 2, 8, 2, 32
    key = jax.random.PRNGKey(0)
    kx, kparam = jax.random.split(key)

    x = jax.random.normal(kx, (B, T, F), jnp.float32)
    params = init_params(kparam, features=F, hidden=H)
    kernel_params = prepare_params(params)

    fwd = jax.jit(gru_regressor_forward)
    out = fwd(x, kernel_params)
    jax.block_until_ready(out)

    assert out.shape == (B, 1) and out.dtype == jnp.float32
    assert bool(jnp.all(jnp.isfinite(out)))

    ref = gru_regressor_reference(x, params)
    err = float(jnp.max(jnp.abs(out - ref)))
    # bf16 serial-path matmuls give small deviations; structural bugs would be O(0.5+).
    assert err < 1e-1, f"max abs err vs f32 reference = {err}"

    print("KERNEL_OK")
</pallas_src>

<mosaic_0001>
module attributes {stable_mosaic.version = 11 : i64} {
  func.func @_gru_wavefront_kernel(%arg0: memref<64x2xf32, #tpu.memory_space<vmem>>, %arg1: memref<2x256xf32, #tpu.memory_space<vmem>>, %arg2: memref<64x256xbf16, #tpu.memory_space<vmem>>, %arg3: memref<1x256xf32, #tpu.memory_space<vmem>>, %arg4: memref<1x32xf32, #tpu.memory_space<vmem>>, %arg5: memref<1x1xf32, #tpu.memory_space<vmem>>, %arg6: memref<8x128xf32, #tpu.memory_space<vmem>>, %arg7: memref<72x256xf32, #tpu.memory_space<vmem>>) attributes {dimension_semantics = [], scalar_prefetch = 0 : i64, scratch_operands = 1 : i64, tpu.core_type = #tpu.core_type<tc>} {
    %c0 = arith.constant 0 : index
    %c0_0 = arith.constant 0 : index
    %0 = vector.load %arg0[%c0, %c0_0] : memref<64x2xf32, #tpu.memory_space<vmem>>, vector<64x2xf32>
    %c0_1 = arith.constant 0 : index
    %c0_2 = arith.constant 0 : index
    %1 = vector.load %arg1[%c0_1, %c0_2] : memref<2x256xf32, #tpu.memory_space<vmem>>, vector<2x256xf32>
    %cst = arith.constant dense<0.000000e+00> : vector<64x256xf32>
    %2 = tpu.matmul %0, %1, %cst {dimension_numbers = #tpu.dot_dimension_numbers<[1], [0], [0], [1], [0, 0, 1, 1], [], []>} : vector<64x2xf32>, vector<2x256xf32>, vector<64x256xf32> -> vector<64x256xf32>
    %c0_3 = arith.constant 0 : index
    %c0_4 = arith.constant 0 : index
    %3 = vector.load %arg7[%c0_3, %c0_4] : memref<72x256xf32, #tpu.memory_space<vmem>>, vector<64x256xf32>
    tpu.vector_store %arg7[%c0_3, %c0_4], %2 {strides = array<i32>} : memref<72x256xf32, #tpu.memory_space<vmem>>, vector<64x256xf32>,
    %cst_5 = arith.constant 0.000000e+00 : f32
    %4 = vector.broadcast %cst_5 : f32 to vector<8x256xf32>
    %c64 = arith.constant 64 : index
    %c0_6 = arith.constant 0 : index
    %5 = vector.load %arg7[%c64, %c0_6] : memref<72x256xf32, #tpu.memory_space<vmem>>, vector<8x256xf32>
    tpu.vector_store %arg7[%c64, %c0_6], %4 {strides = array<i32>} : memref<72x256xf32, #tpu.memory_space<vmem>>, vector<8x256xf32>,
    %c0_7 = arith.constant 0 : index
    %c0_8 = arith.constant 0 : index
    %6 = vector.load %arg3[%c0_7, %c0_8] : memref<1x256xf32, #tpu.memory_space<vmem>>, vector<1x256xf32>
    %7 = vector.shape_cast %6 : vector<1x256xf32> to vector<1x256xf32>
    %8 = vector.broadcast %7 : vector<1x256xf32> to vector<8x256xf32>
    %c0_9 = arith.constant 0 : index
    %c0_10 = arith.constant 0 : index
    %9 = vector.load %arg2[%c0_9, %c0_10] : memref<64x256xbf16, #tpu.memory_space<vmem>>, vector<64x256xbf16>
    %c0_11 = arith.constant 0 : index
    %c0_12 = arith.constant 0 : index
    %10 = vector.load %arg7[%c0_11, %c0_12] : memref<72x256xf32, #tpu.memory_space<vmem>>, vector<8x256xf32>
    %11 = arith.addf %10, %8 : vector<8x256xf32>
    %12 = vector.extract_strided_slice %11 {offsets = [0, 0], sizes = [8, 32], strides = [1, 1]} : vector<8x256xf32> to vector<8x32xf32>
    %13 = arith.negf %12 : vector<8x32xf32>
    %14 = math.exp %13 : vector<8x32xf32>
    %cst_13 = arith.constant 1.000000e+00 : f32
    %15 = vector.broadcast %cst_13 : f32 to vector<8x32xf32>
    %16 = arith.addf %15, %14 : vector<8x32xf32>
    %17 = arith.divf %15, %16 : vector<8x32xf32>
    %18 = vector.extract_strided_slice %11 {offsets = [0, 64], sizes = [8, 32], strides = [1, 1]} : vector<8x256xf32> to vector<8x32xf32>
    %19 = arith.negf %18 : vector<8x32xf32>
    %20 = math.exp %19 : vector<8x32xf32>
    %cst_14 = arith.constant 1.000000e+00 : f32
    %21 = vector.broadcast %cst_14 : f32 to vector<8x32xf32>
    %22 = arith.addf %21, %20 : vector<8x32xf32>
    %23 = arith.divf %21, %22 : vector<8x32xf32>
    %24 = vector.extract_strided_slice %11 {offsets = [0, 128], sizes = [8, 32], strides = [1, 1]} : vector<8x256xf32> to vector<8x32xf32>
    %25 = vector.extract_strided_slice %11 {offsets = [0, 192], sizes = [8, 32], strides = [1, 1]} : vector<8x256xf32> to vector<8x32xf32>
    %26 = arith.mulf %17, %25 : vector<8x32xf32>
    %27 = arith.addf %24, %26 : vector<8x32xf32>
    %28 = math.tanh %27 : vector<8x32xf32>
    %cst_15 = arith.constant 1.000000e+00 : f32
    %29 = vector.broadcast %cst_15 : f32 to vector<8x32xf32>
    %30 = arith.subf %29, %23 : vector<8x32xf32>
    %31 = arith.mulf %30, %28 : vector<8x32xf32>
    %cst_16 = arith.constant 0.000000e+00 : f32
    %32 = vector.broadcast %cst_16 : f32 to vector<8x32xf32>
    %33 = tpu.concatenate %31, %32 in 1 : vector<8x32xf32>, vector<8x32xf32> -> vector<8x64xf32>
    %34 = arith.truncf %33 : vector<8x64xf32> to vector<8x64xbf16>
    %cst_17 = arith.constant dense<0.000000e+00> : vector<8x256xf32>
    %35 = tpu.matmul %34, %9, %cst_17 {dimension_numbers = #tpu.dot_dimension_numbers<[1], [0], [0], [1], [0, 0, 1, 1], [], []>} : vector<8x64xbf16>, vector<64x256xbf16>, vector<8x256xf32> -> vector<8x256xf32>
    %c8 = arith.constant 8 : index
    %c0_18 = arith.constant 0 : index
    %36 = vector.load %arg7[%c8, %c0_18] : memref<72x256xf32, #tpu.memory_space<vmem>>, vector<8x256xf32>
    %37 = arith.addf %35, %36 : vector<8x256xf32>
    %38 = arith.addf %37, %8 : vector<8x256xf32>
    %39 = vector.extract_strided_slice %38 {offsets = [0, 0], sizes = [8, 128], strides = [1, 1]} : vector<8x256xf32> to vector<8x128xf32>
    %40 = arith.negf %39 : vector<8x128xf32>
    %41 = math.exp %40 : vector<8x128xf32>
    %cst_19 = arith.constant 1.000000e+00 : f32
    %42 = vector.broadcast %cst_19 : f32 to vector<8x128xf32>
    %43 = arith.addf %42, %41 : vector<8x128xf32>
    %44 = arith.divf %42, %43 : vector<8x128xf32>
    %45 = vector.extract_strided_slice %44 {offsets = [0, 0], sizes = [8, 64], strides = [1, 1]} : vector<8x128xf32> to vector<8x64xf32>
    %46 = vector.extract_strided_slice %44 {offsets = [0, 64], sizes = [8, 64], strides = [1, 1]} : vector<8x128xf32> to vector<8x64xf32>
    %47 = vector.extract_strided_slice %38 {offsets = [0, 128], sizes = [8, 64], strides = [1, 1]} : vector<8x256xf32> to vector<8x64xf32>
    %48 = vector.extract_strided_slice %38 {offsets = [0, 192], sizes = [8, 64], strides = [1, 1]} : vector<8x256xf32> to vector<8x64xf32>
    %49 = arith.mulf %45, %48 : vector<8x64xf32>
    %50 = arith.addf %47, %49 : vector<8x64xf32>
    %51 = math.tanh %50 : vector<8x64xf32>
    %cst_20 = arith.constant 1.000000e+00 : f32
    %52 = vector.broadcast %cst_20 : f32 to vector<8x64xf32>
    %53 = arith.subf %52, %46 : vector<8x64xf32>
    %54 = arith.mulf %53, %51 : vector<8x64xf32>
    %55 = arith.mulf %46, %33 : vector<8x64xf32>
    %56 = arith.addf %54, %55 : vector<8x64xf32>
    %57 = arith.truncf %56 : vector<8x64xf32> to vector<8x64xbf16>
    %cst_21 = arith.constant dense<0.000000e+00> : vector<8x256xf32>
    %58 = tpu.matmul %57, %9, %cst_21 {dimension_numbers = #tpu.dot_dimension_numbers<[1], [0], [0], [1], [0, 0, 1, 1], [], []>} : vector<8x64xbf16>, vector<64x256xbf16>, vector<8x256xf32> -> vector<8x256xf32>
    %c16 = arith.constant 16 : index
    %c0_22 = arith.constant 0 : index
    %59 = vector.load %arg7[%c16, %c0_22] : memref<72x256xf32, #tpu.memory_space<vmem>>, vector<8x256xf32>
    %60 = arith.addf %58, %59 : vector<8x256xf32>
    %61 = arith.addf %60, %8 : vector<8x256xf32>
    %62 = vector.extract_strided_slice %61 {offsets = [0, 0], sizes = [8, 128], strides = [1, 1]} : vector<8x256xf32> to vector<8x128xf32>
    %63 = arith.negf %62 : vector<8x128xf32>
    %64 = math.exp %63 : vector<8x128xf32>
    %cst_23 = arith.constant 1.000000e+00 : f32
    %65 = vector.broadcast %cst_23 : f32 to vector<8x128xf32>
    %66 = arith.addf %65, %64 : vector<8x128xf32>
    %67 = arith.divf %65, %66 : vector<8x128xf32>
    %68 = vector.extract_strided_slice %67 {offsets = [0, 0], sizes = [8, 64], strides = [1, 1]} : vector<8x128xf32> to vector<8x64xf32>
    %69 = vector.extract_strided_slice %67 {offsets = [0, 64], sizes = [8, 64], strides = [1, 1]} : vector<8x128xf32> to vector<8x64xf32>
    %70 = vector.extract_strided_slice %61 {offsets = [0, 128], sizes = [8, 64], strides = [1, 1]} : vector<8x256xf32> to vector<8x64xf32>
    %71 = vector.extract_strided_slice %61 {offsets = [0, 192], sizes = [8, 64], strides = [1, 1]} : vector<8x256xf32> to vector<8x64xf32>
    %72 = arith.mulf %68, %71 : vector<8x64xf32>
    %73 = arith.addf %70, %72 : vector<8x64xf32>
    %74 = math.tanh %73 : vector<8x64xf32>
    %cst_24 = arith.constant 1.000000e+00 : f32
    %75 = vector.broadcast %cst_24 : f32 to vector<8x64xf32>
    %76 = arith.subf %75, %69 : vector<8x64xf32>
    %77 = arith.mulf %76, %74 : vector<8x64xf32>
    %78 = arith.mulf %69, %56 : vector<8x64xf32>
    %79 = arith.addf %77, %78 : vector<8x64xf32>
    %80 = arith.truncf %79 : vector<8x64xf32> to vector<8x64xbf16>
    %cst_25 = arith.constant dense<0.000000e+00> : vector<8x256xf32>
    %81 = tpu.matmul %80, %9, %cst_25 {dimension_numbers = #tpu.dot_dimension_numbers<[1], [0], [0], [1], [0, 0, 1, 1], [], []>} : vector<8x64xbf16>, vector<64x256xbf16>, vector<8x256xf32> -> vector<8x256xf32>
    %c24 = arith.constant 24 : index
    %c0_26 = arith.constant 0 : index
    %82 = vector.load %arg7[%c24, %c0_26] : memref<72x256xf32, #tpu.memory_space<vmem>>, vector<8x256xf32>
    %83 = arith.addf %81, %82 : vector<8x256xf32>
    %84 = arith.addf %83, %8 : vector<8x256xf32>
    %85 = vector.extract_strided_slice %84 {offsets = [0, 0], sizes = [8, 128], strides = [1, 1]} : vector<8x256xf32> to vector<8x128xf32>
    %86 = arith.negf %85 : vector<8x128xf32>
    %87 = math.exp %86 : vector<8x128xf32>
    %cst_27 = arith.constant 1.000000e+00 : f32
    %88 = vector.broadcast %cst_27 : f32 to vector<8x128xf32>
    %89 = arith.addf %88, %87 : vector<8x128xf32>
    %90 = arith.divf %88, %89 : vector<8x128xf32>
    %91 = vector.extract_strided_slice %90 {offsets = [0, 0], sizes = [8, 64], strides = [1, 1]} : vector<8x128xf32> to vector<8x64xf32>
    %92 = vector.extract_strided_slice %90 {offsets = [0, 64], sizes = [8, 64], strides = [1, 1]} : vector<8x128xf32> to vector<8x64xf32>
    %93 = vector.extract_strided_slice %84 {offsets = [0, 128], sizes = [8, 64], strides = [1, 1]} : vector<8x256xf32> to vector<8x64xf32>
    %94 = vector.extract_strided_slice %84 {offsets = [0, 192], sizes = [8, 64], strides = [1, 1]} : vector<8x256xf32> to vector<8x64xf32>
    %95 = arith.mulf %91, %94 : vector<8x64xf32>
    %96 = arith.addf %93, %95 : vector<8x64xf32>
    %97 = math.tanh %96 : vector<8x64xf32>
    %cst_28 = arith.constant 1.000000e+00 : f32
    %98 = vector.broadcast %cst_28 : f32 to vector<8x64xf32>
    %99 = arith.subf %98, %92 : vector<8x64xf32>
    %100 = arith.mulf %99, %97 : vector<8x64xf32>
    %101 = arith.mulf %92, %79 : vector<8x64xf32>
    %102 = arith.addf %100, %101 : vector<8x64xf32>
    %103 = arith.truncf %102 : vector<8x64xf32> to vector<8x64xbf16>
    %cst_29 = arith.constant dense<0.000000e+00> : vector<8x256xf32>
    %104 = tpu.matmul %103, %9, %cst_29 {dimension_numbers = #tpu.dot_dimension_numbers<[1], [0], [0], [1], [0, 0, 1, 1], [], []>} : vector<8x64xbf16>, vector<64x256xbf16>, vector<8x256xf32> -> vector<8x256xf32>
    %c32 = arith.constant 32 : index
    %c0_30 = arith.constant 0 : index
    %105 = vector.load %arg7[%c32, %c0_30] : memref<72x256xf32, #tpu.memory_space<vmem>>, vector<8x256xf32>
    %106 = arith.addf %104, %105 : vector<8x256xf32>
    %107 = arith.addf %106, %8 : vector<8x256xf32>
    %108 = vector.extract_strided_slice %107 {offsets = [0, 0], sizes = [8, 128], strides = [1, 1]} : vector<8x256xf32> to vector<8x128xf32>
    %109 = arith.negf %108 : vector<8x128xf32>
    %110 = math.exp %109 : vector<8x128xf32>
    %cst_31 = arith.constant 1.000000e+00 : f32
    %111 = vector.broadcast %cst_31 : f32 to vector<8x128xf32>
    %112 = arith.addf %111, %110 : vector<8x128xf32>
    %113 = arith.divf %111, %112 : vector<8x128xf32>
    %114 = vector.extract_strided_slice %113 {offsets = [0, 0], sizes = [8, 64], strides = [1, 1]} : vector<8x128xf32> to vector<8x64xf32>
    %115 = vector.extract_strided_slice %113 {offsets = [0, 64], sizes = [8, 64], strides = [1, 1]} : vector<8x128xf32> to vector<8x64xf32>
    %116 = vector.extract_strided_slice %107 {offsets = [0, 128], sizes = [8, 64], strides = [1, 1]} : vector<8x256xf32> to vector<8x64xf32>
    %117 = vector.extract_strided_slice %107 {offsets = [0, 192], sizes = [8, 64], strides = [1, 1]} : vector<8x256xf32> to vector<8x64xf32>
    %118 = arith.mulf %114, %117 : vector<8x64xf32>
    %119 = arith.addf %116, %118 : vector<8x64xf32>
    %120 = math.tanh %119 : vector<8x64xf32>
    %cst_32 = arith.constant 1.000000e+00 : f32
    %121 = vector.broadcast %cst_32 : f32 to vector<8x64xf32>
    %122 = arith.subf %121, %115 : vector<8x64xf32>
    %123 = arith.mulf %122, %120 : vector<8x64xf32>
    %124 = arith.mulf %115, %102 : vector<8x64xf32>
    %125 = arith.addf %123, %124 : vector<8x64xf32>
    %126 = arith.truncf %125 : vector<8x64xf32> to vector<8x64xbf16>
    %cst_33 = arith.constant dense<0.000000e+00> : vector<8x256xf32>
    %127 = tpu.matmul %126, %9, %cst_33 {dimension_numbers = #tpu.dot_dimension_numbers<[1], [0], [0], [1], [0, 0, 1, 1], [], []>} : vector<8x64xbf16>, vector<64x256xbf16>, vector<8x256xf32> -> vector<8x256xf32>
    %c40 = arith.constant 40 : index
    %c0_34 = arith.constant 0 : index
    %128 = vector.load %arg7[%c40, %c0_34] : memref<72x256xf32, #tpu.memory_space<vmem>>, vector<8x256xf32>
    %129 = arith.addf %127, %128 : vector<8x256xf32>
    %130 = arith.addf %129, %8 : vector<8x256xf32>
    %131 = vector.extract_strided_slice %130 {offsets = [0, 0], sizes = [8, 128], strides = [1, 1]} : vector<8x256xf32> to vector<8x128xf32>
    %132 = arith.negf %131 : vector<8x128xf32>
    %133 = math.exp %132 : vector<8x128xf32>
    %cst_35 = arith.constant 1.000000e+00 : f32
    %134 = vector.broadcast %cst_35 : f32 to vector<8x128xf32>
    %135 = arith.addf %134, %133 : vector<8x128xf32>
    %136 = arith.divf %134, %135 : vector<8x128xf32>
    %137 = vector.extract_strided_slice %136 {offsets = [0, 0], sizes = [8, 64], strides = [1, 1]} : vector<8x128xf32> to vector<8x64xf32>
    %138 = vector.extract_strided_slice %136 {offsets = [0, 64], sizes = [8, 64], strides = [1, 1]} : vector<8x128xf32> to vector<8x64xf32>
    %139 = vector.extract_strided_slice %130 {offsets = [0, 128], sizes = [8, 64], strides = [1, 1]} : vector<8x256xf32> to vector<8x64xf32>
    %140 = vector.extract_strided_slice %130 {offsets = [0, 192], sizes = [8, 64], strides = [1, 1]} : vector<8x256xf32> to vector<8x64xf32>
    %141 = arith.mulf %137, %140 : vector<8x64xf32>
    %142 = arith.addf %139, %141 : vector<8x64xf32>
    %143 = math.tanh %142 : vector<8x64xf32>
    %cst_36 = arith.constant 1.000000e+00 : f32
    %144 = vector.broadcast %cst_36 : f32 to vector<8x64xf32>
    %145 = arith.subf %144, %138 : vector<8x64xf32>
    %146 = arith.mulf %145, %143 : vector<8x64xf32>
    %147 = arith.mulf %138, %125 : vector<8x64xf32>
    %148 = arith.addf %146, %147 : vector<8x64xf32>
    %149 = arith.truncf %148 : vector<8x64xf32> to vector<8x64xbf16>
    %cst_37 = arith.constant dense<0.000000e+00> : vector<8x256xf32>
    %150 = tpu.matmul %149, %9, %cst_37 {dimension_numbers = #tpu.dot_dimension_numbers<[1], [0], [0], [1], [0, 0, 1, 1], [], []>} : vector<8x64xbf16>, vector<64x256xbf16>, vector<8x256xf32> -> vector<8x256xf32>
    %c48 = arith.constant 48 : index
    %c0_38 = arith.constant 0 : index
    %151 = vector.load %arg7[%c48, %c0_38] : memref<72x256xf32, #tpu.memory_space<vmem>>, vector<8x256xf32>
    %152 = arith.addf %150, %151 : vector<8x256xf32>
    %153 = arith.addf %152, %8 : vector<8x256xf32>
    %154 = vector.extract_strided_slice %153 {offsets = [0, 0], sizes = [8, 128], strides = [1, 1]} : vector<8x256xf32> to vector<8x128xf32>
    %155 = arith.negf %154 : vector<8x128xf32>
    %156 = math.exp %155 : vector<8x128xf32>
    %cst_39 = arith.constant 1.000000e+00 : f32
    %157 = vector.broadcast %cst_39 : f32 to vector<8x128xf32>
    %158 = arith.addf %157, %156 : vector<8x128xf32>
    %159 = arith.divf %157, %158 : vector<8x128xf32>
    %160 = vector.extract_strided_slice %159 {offsets = [0, 0], sizes = [8, 64], strides = [1, 1]} : vector<8x128xf32> to vector<8x64xf32>
    %161 = vector.extract_strided_slice %159 {offsets = [0, 64], sizes = [8, 64], strides = [1, 1]} : vector<8x128xf32> to vector<8x64xf32>
    %162 = vector.extract_strided_slice %153 {offsets = [0, 128], sizes = [8, 64], strides = [1, 1]} : vector<8x256xf32> to vector<8x64xf32>
    %163 = vector.extract_strided_slice %153 {offsets = [0, 192], sizes = [8, 64], strides = [1, 1]} : vector<8x256xf32> to vector<8x64xf32>
    %164 = arith.mulf %160, %163 : vector<8x64xf32>
    %165 = arith.addf %162, %164 : vector<8x64xf32>
    %166 = math.tanh %165 : vector<8x64xf32>
    %cst_40 = arith.constant 1.000000e+00 : f32
    %167 = vector.broadcast %cst_40 : f32 to vector<8x64xf32>
    %168 = arith.subf %167, %161 : vector<8x64xf32>
    %169 = arith.mulf %168, %166 : vector<8x64xf32>
    %170 = arith.mulf %161, %148 : vector<8x64xf32>
    %171 = arith.addf %169, %170 : vector<8x64xf32>
    %172 = arith.truncf %171 : vector<8x64xf32> to vector<8x64xbf16>
    %cst_41 = arith.constant dense<0.000000e+00> : vector<8x256xf32>
    %173 = tpu.matmul %172, %9, %cst_41 {dimension_numbers = #tpu.dot_dimension_numbers<[1], [0], [0], [1], [0, 0, 1, 1], [], []>} : vector<8x64xbf16>, vector<64x256xbf16>, vector<8x256xf32> -> vector<8x256xf32>
    %c56 = arith.constant 56 : index
    %c0_42 = arith.constant 0 : index
    %174 = vector.load %arg7[%c56, %c0_42] : memref<72x256xf32, #tpu.memory_space<vmem>>, vector<8x256xf32>
    %175 = arith.addf %173, %174 : vector<8x256xf32>
    %176 = arith.addf %175, %8 : vector<8x256xf32>
    %177 = vector.extract_strided_slice %176 {offsets = [0, 0], sizes = [8, 128], strides = [1, 1]} : vector<8x256xf32> to vector<8x128xf32>
    %178 = arith.negf %177 : vector<8x128xf32>
    %179 = math.exp %178 : vector<8x128xf32>
    %cst_43 = arith.constant 1.000000e+00 : f32
    %180 = vector.broadcast %cst_43 : f32 to vector<8x128xf32>
    %181 = arith.addf %180, %179 : vector<8x128xf32>
    %182 = arith.divf %180, %181 : vector<8x128xf32>
    %183 = vector.extract_strided_slice %182 {offsets = [0, 0], sizes = [8, 64], strides = [1, 1]} : vector<8x128xf32> to vector<8x64xf32>
    %184 = vector.extract_strided_slice %182 {offsets = [0, 64], sizes = [8, 64], strides = [1, 1]} : vector<8x128xf32> to vector<8x64xf32>
    %185 = vector.extract_strided_slice %176 {offsets = [0, 128], sizes = [8, 64], strides = [1, 1]} : vector<8x256xf32> to vector<8x64xf32>
    %186 = vector.extract_strided_slice %176 {offsets = [0, 192], sizes = [8, 64], strides = [1, 1]} : vector<8x256xf32> to vector<8x64xf32>
    %187 = arith.mulf %183, %186 : vector<8x64xf32>
    %188 = arith.addf %185, %187 : vector<8x64xf32>
    %189 = math.tanh %188 : vector<8x64xf32>
    %cst_44 = arith.constant 1.000000e+00 : f32
    %190 = vector.broadcast %cst_44 : f32 to vector<8x64xf32>
    %191 = arith.subf %190, %184 : vector<8x64xf32>
    %192 = arith.mulf %191, %189 : vector<8x64xf32>
    %193 = arith.mulf %184, %171 : vector<8x64xf32>
    %194 = arith.addf %192, %193 : vector<8x64xf32>
    %195 = arith.truncf %194 : vector<8x64xf32> to vector<8x64xbf16>
    %cst_45 = arith.constant dense<0.000000e+00> : vector<8x256xf32>
    %196 = tpu.matmul %195, %9, %cst_45 {dimension_numbers = #tpu.dot_dimension_numbers<[1], [0], [0], [1], [0, 0, 1, 1], [], []>} : vector<8x64xbf16>, vector<64x256xbf16>, vector<8x256xf32> -> vector<8x256xf32>
    %c64_46 = arith.constant 64 : index
    %c0_47 = arith.constant 0 : index
    %197 = vector.load %arg7[%c64_46, %c0_47] : memref<72x256xf32, #tpu.memory_space<vmem>>, vector<8x256xf32>
    %198 = arith.addf %196, %197 : vector<8x256xf32>
    %199 = arith.addf %198, %8 : vector<8x256xf32>
    %200 = vector.extract_strided_slice %199 {offsets = [0, 0], sizes = [8, 128], strides = [1, 1]} : vector<8x256xf32> to vector<8x128xf32>
    %201 = arith.negf %200 : vector<8x128xf32>
    %202 = math.exp %201 : vector<8x128xf32>
    %cst_48 = arith.constant 1.000000e+00 : f32
    %203 = vector.broadcast %cst_48 : f32 to vector<8x128xf32>
    %204 = arith.addf %203, %202 : vector<8x128xf32>
    %205 = arith.divf %203, %204 : vector<8x128xf32>
    %206 = vector.extract_strided_slice %205 {offsets = [0, 0], sizes = [8, 64], strides = [1, 1]} : vector<8x128xf32> to vector<8x64xf32>
    %207 = vector.extract_strided_slice %205 {offsets = [0, 64], sizes = [8, 64], strides = [1, 1]} : vector<8x128xf32> to vector<8x64xf32>
    %208 = vector.extract_strided_slice %199 {offsets = [0, 128], sizes = [8, 64], strides = [1, 1]} : vector<8x256xf32> to vector<8x64xf32>
    %209 = vector.extract_strided_slice %199 {offsets = [0, 192], sizes = [8, 64], strides = [1, 1]} : vector<8x256xf32> to vector<8x64xf32>
    %210 = arith.mulf %206, %209 : vector<8x64xf32>
    %211 = arith.addf %208, %210 : vector<8x64xf32>
    %212 = math.tanh %211 : vector<8x64xf32>
    %cst_49 = arith.constant 1.000000e+00 : f32
    %213 = vector.broadcast %cst_49 : f32 to vector<8x64xf32>
    %214 = arith.subf %213, %207 : vector<8x64xf32>
    %215 = arith.mulf %214, %212 : vector<8x64xf32>
    %216 = arith.mulf %207, %194 : vector<8x64xf32>
    %217 = arith.addf %215, %216 : vector<8x64xf32>
    %218 = vector.extract_strided_slice %217 {offsets = [0, 32], sizes = [8, 32], strides = [1, 1]} : vector<8x64xf32> to vector<8x32xf32>
    %c0_50 = arith.constant 0 : index
    %c0_51 = arith.constant 0 : index
    %219 = vector.load %arg4[%c0_50, %c0_51] : memref<1x32xf32, #tpu.memory_space<vmem>>, vector<1x32xf32>
    %220 = vector.broadcast %219 : vector<1x32xf32> to vector<8x32xf32>
    %221 = arith.mulf %218, %220 : vector<8x32xf32>
    %cst_52 = arith.constant dense<0.000000e+00> : vector<8xf32>
    %222 = vector.multi_reduction <add>, %221, %cst_52 [1] : vector<8x32xf32> to vector<8xf32>
    %223 = vector.shape_cast %222 : vector<8xf32> to vector<8x1xf32>
    %c0_53 = arith.constant 0 : index
    %c0_54 = arith.constant 0 : index
    %224 = vector.load %arg5[%c0_53, %c0_54] : memref<1x1xf32, #tpu.memory_space<vmem>>, vector<1x1xf32>
    %225 = vector.broadcast %224 : vector<1x1xf32> to vector<8x1xf32>
    %226 = arith.addf %223, %225 : vector<8x1xf32>
    %227 = vector.shape_cast %226 : vector<8x1xf32> to vector<8x1xf32>
    %228 = vector.broadcast %227 : vector<8x1xf32> to vector<8x128xf32>
    %c0_55 = arith.constant 0 : index
    %c0_56 = arith.constant 0 : index
    %229 = vector.load %arg6[%c0_55, %c0_56] : memref<8x128xf32, #tpu.memory_space<vmem>>, vector<8x128xf32>
    tpu.vector_store %arg6[%c0_55, %c0_56], %228 {strides = array<i32>} : memref<8x128xf32, #tpu.memory_space<vmem>>, vector<8x128xf32>,
    return
  }
}

</mosaic_0001>

<llo_original>
// kernel: gru_regressor_forward.1
$region0: #{gru_regressor_forward.1}
  #allocation0 [shape = 'u32[]', space=smem, size = 0x4, offset = 0x4, fixed_abs, tag = 'smem constant byte address 0x4 - core index']
  #allocation1 [shape = 'u32[144,128]{1,0:T(1,128)}', space=vmem, size = 0x12000, scoped, tag = 'internal scratch']
  #allocation2 [shape = 'f32[72,256]{1,0:T(8,128)}', space=vmem, size = 0x12000, scoped, tag = 'scratch operand']
  #allocation3 [shape = 'f32[1,1]{1,0:T(1,128)S(1)}', space=vmem, size = 0x200, scoped, tag = 'scoped memory for gru_regressor_forward.1']
  %s0 = inlined_call_operand.vmem [shape: f32[64,2], index: 0, kind: input, shape index: {}]
  %s1 = inlined_call_operand.vmem [shape: f32[2,256], index: 1, kind: input, shape index: {}]
  %s2 = inlined_call_operand.vmem [shape: bf16[64,256], index: 2, kind: input, shape index: {}]
  %s3 = inlined_call_operand.vmem [shape: f32[1,256], index: 3, kind: input, shape index: {}]
  %s4 = inlined_call_operand.vmem [shape: f32[1,32], index: 4, kind: input, shape index: {}]
  %s5 = inlined_call_operand.<no memory space> [shape: f32[1,1], index: 5, kind: input, shape index: {}]
  %s6 = inlined_call_operand.vmem [shape: f32[8,128], index: 6, kind: output, shape index: {}]
  %s7 = sld [smem:[#allocation0]]
  $region34: #{gru_regressor_forward.1} parent=0
    _
  %s9 = ssub.s32 1, %s7
  %s10 = scalar_select 0, %s9, %s7
  %v11 = vstv %s5
  %12 = vst [vmem:[#allocation3] sm:$0x1] %v11
  // Predicated region
  $region2: #{gru_regressor_forward.1} parent=0 // pred_check
    _
  $region3: #{gru_regressor_forward.1} parent=0 // pred_check_branch
    %14 = sbr.rel (0) target = $region5
  $region4: #{gru_regressor_forward.1} parent=0 // pred_region
    _
  $region5: #{gru_regressor_forward.1} parent=0 // pred_fallthru
    _
  // Predicated region
  $region6: #{gru_regressor_forward.1} parent=0 // pred_check
    _
  $region7: #{gru_regressor_forward.1} parent=0 // pred_check_branch
    %16 = sbr.rel (0) target = $region9
  $region8: #{gru_regressor_forward.1} parent=0 // pred_region
    _
  $region9: #{gru_regressor_forward.1} parent=0 // pred_fallthru
    _
  // Predicated region
  $region10: #{gru_regressor_forward.1} parent=0 // pred_check
    _
  $region11: #{gru_regressor_forward.1} parent=0 // pred_check_branch
    %18 = sbr.rel (0) target = $region13
  $region12: #{gru_regressor_forward.1} parent=0 // pred_region
    _
  $region13: #{gru_regressor_forward.1} parent=0 // pred_fallthru
    _
  // Predicated region
  $region14: #{gru_regressor_forward.1} parent=0 // pred_check
    _
  $region15: #{gru_regressor_forward.1} parent=0 // pred_check_branch
    %20 = sbr.rel (0) target = $region17
  $region16: #{gru_regressor_forward.1} parent=0 // pred_region
    _
  $region17: #{gru_regressor_forward.1} parent=0 // pred_fallthru
    _
  // Predicated region
  $region18: #{gru_regressor_forward.1} parent=0 // pred_check
    _
  $region19: #{gru_regressor_forward.1} parent=0 // pred_check_branch
    %22 = sbr.rel (0) target = $region21
  $region20: #{gru_regressor_forward.1} parent=0 // pred_region
    _
  $region21: #{gru_regressor_forward.1} parent=0 // pred_fallthru
    _
  // Predicated region
  $region22: #{gru_regressor_forward.1} parent=0 // pred_check
    _
  $region23: #{gru_regressor_forward.1} parent=0 // pred_check_branch
    %24 = sbr.rel (0) target = $region25
  $region24: #{gru_regressor_forward.1} parent=0 // pred_region
    _
  $region25: #{gru_regressor_forward.1} parent=0 // pred_fallthru
    _
  %v26 = vld [vmem:[%s0] sm:$0xff]
  %v27 = vld [vmem:[%s0 + $0x8] sm:$0xff]
  %v28 = vld [vmem:[%s0 + $0x10] sm:$0xff]
  %v29 = vld [vmem:[%s0 + $0x18] sm:$0xff]
  %v30 = vld [vmem:[%s0 + $0x20] sm:$0xff]
  %v31 = vld [vmem:[%s0 + $0x28] sm:$0xff]
  %v32 = vld [vmem:[%s0 + $0x30] sm:$0xff]
  %v33 = vld [vmem:[%s0 + $0x38] sm:$0xff]
  %v34 = vld [vmem:[%s1] sm:$0xf]
  %v37 = vunpack.c.l.s4 1983009808
  %v38 = vunpack.c.0.s8 %v37
  %v39 = vlaneseq
  %v40 = vshrl.u32 %v39, 7
  %v41 = vsub.s32 %v38, %v40
  %v42 = vrot.slane %v34, %v41
  %v43 = vcombine.high %v42, %v42
  %vm44 = vcmask 15360
  %v46 = vsel %vm44, %v26, 0
  %v49 = vsel %vm44, %v27, 0
  %v52 = vsel %vm44, %v28, 0
  %v55 = vsel %vm44, %v29, 0
  %v58 = vsel %vm44, %v30, 0
  %v61 = vsel %vm44, %v31, 0
  %v64 = vsel %vm44, %v32, 0
  %v67 = vsel %vm44, %v33, 0
  %vm69 = vcmask 1041408
  %v70 = vsel %vm69, %v42, 0
  %v72 = vsel %vm69, %v43, 0
  %74 = vmatprep.subr.mxu0 %v72
  %75 = vmatpush1.msra.mxu0 %v70
  %76 = vmatprep.subr.mxu0 0.0
  %77 = vmatpush1.msra.mxu0 0.0
  %78 = vmatprep.subr.mxu0 0.0
  %79 = vmatpush1.msra.mxu0 0.0
  %80 = vmatprep.subr.mxu0 0.0
  %81 = vmatpush1.msra.mxu0 0.0
  %82 = vmatprep.subr.mxu0 0.0
  %83 = vmatpush1.msra.mxu0 0.0
  %84 = vmatprep.subr.mxu0 0.0
  %85 = vmatpush1.msra.mxu0 0.0
  %86 = vmatprep.subr.mxu0 0.0
  %87 = vmatpush1.msra.mxu0 0.0
  %88 = vmatprep.subr.mxu0 0.0
  %89 = vmatpush1.msra.mxu0 0.0
  %90 = vmatprep.subr.mxu0 0.0
  %91 = vmatpush1.msra.mxu0 0.0
  %92 = vmatprep.subr.mxu0 0.0
  %93 = vmatpush1.msra.mxu0 0.0
  %94 = vmatprep.subr.mxu0 0.0
  %95 = vmatpush1.msra.mxu0 0.0
  %96 = vmatprep.subr.mxu0 0.0
  %97 = vmatpush1.msra.mxu0 0.0
  %98 = vmatprep.subr.mxu0 0.0
  %99 = vmatpush1.msra.mxu0 0.0
  %100 = vmatprep.subr.mxu0 0.0
  %101 = vmatpush1.msra.mxu0 0.0
  %102 = vmatprep.subr.mxu0 0.0
  %103 = vmatpush1.msra.mxu0 0.0
  %104 = vmatprep.subr.mxu0 0.0
  %105 = vmatpush1.msra.mxu0 0.0
  %106 = vmatprep.subr.mxu0 0.0
  %107 = vmatpush1.msra.mxu0 0.0
  %108 = vmatprep.subr.mxu0 0.0
  %109 = vmatpush1.msra.mxu0 0.0
  %110 = vmatprep.subr.mxu0 0.0
  %111 = vmatpush1.msra.mxu0 0.0
  %112 = vmatprep.subr.mxu0 0.0
  %113 = vmatpush1.msra.mxu0 0.0
  %114 = vmatprep.subr.mxu0 0.0
  %115 = vmatpush1.msra.mxu0 0.0
  %116 = vmatprep.subr.mxu0 0.0
  %117 = vmatpush1.msra.mxu0 0.0
  %118 = vmatprep.subr.mxu0 0.0
  %119 = vmatpush1.msra.mxu0 0.0
  %120 = vmatprep.subr.mxu0 0.0
  %121 = vmatpush1.msra.mxu0 0.0
  %122 = vmatprep.subr.mxu0 0.0
  %123 = vmatpush1.msra.mxu0 0.0
  %124 = vmatprep.subr.mxu0 0.0
  %125 = vmatpush1.msra.mxu0 0.0
  %126 = vmatprep.subr.mxu0 0.0
  %127 = vmatpush1.msra.mxu0 0.0
  %128 = vmatprep.subr.mxu0 0.0
  %129 = vmatpush1.msra.mxu0 0.0
  %130 = vmatprep.subr.mxu0 0.0
  %131 = vmatpush1.msra.mxu0 0.0
  %132 = vmatprep.subr.mxu0 0.0
  %133 = vmatpush1.msra.mxu0 0.0
  %134 = vmatprep.subr.mxu0 0.0
  %135 = vmatpush1.msra.mxu0 0.0
  %136 = vmatprep.subr.mxu0 0.0
  %137 = vmatpush1.msra.mxu0 0.0
  %138 = vmatprep.mubr.f32.mxu0 0.0
  %139 = vmatmul.mubr.f32.gmra.mrb[0].mxu0 %v46
  %v140 = vpop.f32.mrb[0].mxu0
  %v141 = vadd.f32 0.0, %v140
  %v142 = vpop.f32.mrb[0].mxu0
  %v143 = vadd.f32 0.0, %v142
  %144 = vmatprep.mubr.f32.mxu0 0.0
  %145 = vmatmul.mubr.f32.gmra.mrb[0].mxu0 %v49
  %v146 = vpop.f32.mrb[0].mxu0
  %v147 = vadd.f32 0.0, %v146
  %v148 = vpop.f32.mrb[0].mxu0
  %v149 = vadd.f32 0.0, %v148
  %150 = vmatprep.mubr.f32.mxu0 0.0
  %151 = vmatmul.mubr.f32.gmra.mrb[0].mxu0 %v52
  %v152 = vpop.f32.mrb[0].mxu0
  %v153 = vadd.f32 0.0, %v152
  %v154 = vpop.f32.mrb[0].mxu0
  %v155 = vadd.f32 0.0, %v154
  %156 = vmatprep.mubr.f32.mxu0 0.0
  %157 = vmatmul.mubr.f32.gmra.mrb[0].mxu0 %v55
  %v158 = vpop.f32.mrb[0].mxu0
  %v159 = vadd.f32 0.0, %v158
  %v160 = vpop.f32.mrb[0].mxu0
  %v161 = vadd.f32 0.0, %v160
  %162 = vmatprep.mubr.f32.mxu0 0.0
  %163 = vmatmul.mubr.f32.gmra.mrb[0].mxu0 %v58
  %v164 = vpop.f32.mrb[0].mxu0
  %v165 = vadd.f32 0.0, %v164
  %v166 = vpop.f32.mrb[0].mxu0
  %v167 = vadd.f32 0.0, %v166
  %168 = vmatprep.mubr.f32.mxu0 0.0
  %169 = vmatmul.mubr.f32.gmra.mrb[0].mxu0 %v61
  %v170 = vpop.f32.mrb[0].mxu0
  %v171 = vadd.f32 0.0, %v170
  %v172 = vpop.f32.mrb[0].mxu0
  %v173 = vadd.f32 0.0, %v172
  %174 = vmatprep.mubr.f32.mxu0 0.0
  %175 = vmatmul.mubr.f32.gmra.mrb[0].mxu0 %v64
  %v176 = vpop.f32.mrb[0].mxu0
  %v177 = vadd.f32 0.0, %v176
  %v178 = vpop.f32.mrb[0].mxu0
  %v179 = vadd.f32 0.0, %v178
  %180 = vmatprep.mubr.f32.mxu0 0.0
  %181 = vmatmul.mubr.f32.gmra.mrb[0].mxu0 %v67
  %v182 = vpop.f32.mrb[0].mxu0
  %v183 = vadd.f32 0.0, %v182
  %v184 = vpop.f32.mrb[0].mxu0
  %v185 = vadd.f32 0.0, %v184
  %186 = vdwg.mxu0
  %187 = vst [vmem:[#allocation2] sm:$0xff] %v141
  %188 = vst [vmem:[#allocation2 + $0x8] sm:$0xff] %v143
  %189 = vst [vmem:[#allocation2 + $0x10] sm:$0xff] %v147
  %190 = vst [vmem:[#allocation2 + $0x18] sm:$0xff] %v149
  %191 = vst [vmem:[#allocation2 + $0x20] sm:$0xff] %v153
  %192 = vst [vmem:[#allocation2 + $0x28] sm:$0xff] %v155
  %193 = vst [vmem:[#allocation2 + $0x30] sm:$0xff] %v159
  %194 = vst [vmem:[#allocation2 + $0x38] sm:$0xff] %v161
  %195 = vst [vmem:[#allocation2 + $0x40] sm:$0xff] %v165
  %196 = vst [vmem:[#allocation2 + $0x48] sm:$0xff] %v167
  %197 = vst [vmem:[#allocation2 + $0x50] sm:$0xff] %v171
  %198 = vst [vmem:[#allocation2 + $0x58] sm:$0xff] %v173
  %199 = vst [vmem:[#allocation2 + $0x60] sm:$0xff] %v177
  %200 = vst [vmem:[#allocation2 + $0x68] sm:$0xff] %v179
  %201 = vst [vmem:[#allocation2 + $0x70] sm:$0xff] %v183
  %202 = vst [vmem:[#allocation2 + $0x78] sm:$0xff] %v185
  %203 = vst [vmem:[#allocation2 + $0x80] sm:$0xff] 0.0
  %204 = vst [vmem:[#allocation2 + $0x88] sm:$0xff] 0.0
  %v205 = vld [vmem:[%s3] sm:$0x3]
  %v207 = vlaneseq
  %v208 = vshrl.u32 %v207, 7
  %v209 = vsub.s32 0, %v208
  %v210 = vrot.slane %v205, %v209
  %v211 = vlaneseq
  %v212 = vshrl.u32 %v211, 7
  %v213 = vsub.s32 1, %v212
  %v214 = vrot.slane %v205, %v213
  %v217 = vld [vmem:[%s2] sm:$0xff]
  %v218 = vld [vmem:[%s2 + $0x8] sm:$0xff]
  %v219 = vld [vmem:[%s2 + $0x10] sm:$0xff]
  %v220 = vld [vmem:[%s2 + $0x18] sm:$0xff]
  %v221 = vld [vmem:[%s2 + $0x20] sm:$0xff]
  %v222 = vld [vmem:[%s2 + $0x28] sm:$0xff]
  %v223 = vld [vmem:[%s2 + $0x30] sm:$0xff]
  %v224 = vld [vmem:[%s2 + $0x38] sm:$0xff]
  %v225 = vld [vmem:[#allocation2] sm:$0xff]
  %v226 = vld [vmem:[#allocation2 + $0x8] sm:$0xff]
  %v227 = vadd.f32 %v225, %v210
  %v228 = vadd.f32 %v226, %v214
  %v229 = vxor.u32 %v227, 2147483648
  %v230 = vmul.f32 %v229, 1.442695
  %v231 = vpow.pop %v230
  %v232 = vadd.f32 %v231, 1.0
  %v233 = vrcp.pop %v232
  %v234 = vmul.f32 1.0, %v233
  %236 = vrot.lane.b32.xlu0 %v228, 64
  %v237 = vpop.permute.xlu0 %236
  %v239 = vmul.f32 %v234, %v237
  %v240 = vadd.f32 %v228, %v239
  %v241 = vtanh.pop %v240
  %v242 = vsub.f32 1.0, %v234
  %244 = vrot.lane.b32.xlu0 %v241, 64
  %v245 = vpop.permute.xlu0 %244
  %v247 = vmul.f32 %v242, %v245
  %249 = vrot.lane.b32.xlu0 %v247, 64
  %v250 = vpop.permute.xlu0 %249
  %vm252 = vcmask 261120
  %v253 = vsel %vm252, %v250, 0.0
  %v254 = vpack.c.bf16 %v253, %v253
  %v255 = vld [vmem:[#allocation2 + $0x10] sm:$0xff]
  %v256 = vld [vmem:[#allocation2 + $0x18] sm:$0xff]
  %v265 = vunpack.c.l.b16 %v217
  %v266 = vunpack.c.h.b16 %v217
  %v267 = vunpack.c.l.b16 %v218
  %v268 = vunpack.c.h.b16 %v218
  %v269 = vunpack.c.l.b16 %v219
  %v270 = vunpack.c.h.b16 %v219
  %v271 = vunpack.c.l.b16 %v220
  %v272 = vunpack.c.h.b16 %v220
  %v273 = vunpack.c.l.b16 %v221
  %v274 = vunpack.c.h.b16 %v221
  %v275 = vunpack.c.l.b16 %v222
  %v276 = vunpack.c.h.b16 %v222
  %v277 = vunpack.c.l.b16 %v223
  %v278 = vunpack.c.h.b16 %v223
  %v279 = vunpack.c.l.b16 %v224
  %v280 = vunpack.c.h.b16 %v224
  %v281 = vpack.c.b16 %v267, %v265
  %v282 = vpack.c.b16 %v268, %v266
  %v283 = vpack.c.b16 %v271, %v269
  %v284 = vpack.c.b16 %v272, %v270
  %v285 = vpack.c.b16 %v275, %v273
  %v286 = vpack.c.b16 %v276, %v274
  %v287 = vpack.c.b16 %v279, %v277
  %v288 = vpack.c.b16 %v280, %v278
  %vm297 = vcmask 523264
  %v299 = vsel %vm297, %v254, 0
  %301 = vmatprep.subr.bf16.mxu0 %v282
  %302 = vmatpush1.bf16.msra.mxu0 %v281
  %303 = vmatprep.subr.bf16.mxu0 %v284
  %304 = vmatpush1.bf16.msra.mxu0 %v283
  %305 = vmatprep.subr.bf16.mxu0 %v286
  %306 = vmatpush1.bf16.msra.mxu0 %v285
  %307 = vmatprep.subr.bf16.mxu0 %v288
  %308 = vmatpush1.bf16.msra.mxu0 %v287
  %309 = vmatprep.subr.bf16.mxu0 0
  %310 = vmatpush1.bf16.msra.mxu0 0
  %311 = vmatprep.subr.bf16.mxu0 0
  %312 = vmatpush1.bf16.msra.mxu0 0
  %313 = vmatprep.subr.bf16.mxu0 0
  %314 = vmatpush1.bf16.msra.mxu0 0
  %315 = vmatprep.subr.bf16.mxu0 0
  %316 = vmatpush1.bf16.msra.mxu0 0
  %317 = vmatprep.subr.bf16.mxu0 0
  %318 = vmatpush1.bf16.msra.mxu0 0
  %319 = vmatprep.subr.bf16.mxu0 0
  %320 = vmatpush1.bf16.msra.mxu0 0
  %321 = vmatprep.subr.bf16.mxu0 0
  %322 = vmatpush1.bf16.msra.mxu0 0
  %323 = vmatprep.subr.bf16.mxu0 0
  %324 = vmatpush1.bf16.msra.mxu0 0
  %325 = vmatprep.subr.bf16.mxu0 0
  %326 = vmatpush1.bf16.msra.mxu0 0
  %327 = vmatprep.subr.bf16.mxu0 0
  %328 = vmatpush1.bf16.msra.mxu0 0
  %329 = vmatprep.subr.bf16.mxu0 0
  %330 = vmatpush1.bf16.msra.mxu0 0
  %331 = vmatprep.subr.bf16.mxu0 0
  %332 = vmatpush1.bf16.msra.mxu0 0
  %333 = vmatprep.mubr.bf16.mxu0 0
  %334 = vmatmul.mubr.bf16.gmra.mrb[0].mxu0 %v299
  %v335 = vpop.f32.mrb[0].mxu0
  %v336 = vadd.f32 %v255, %v335
  %v337 = vpop.f32.mrb[0].mxu0
  %v338 = vadd.f32 %v256, %v337
  %v339 = vpop.f32.mrb[0].mxu0
  %v340 = vpop.f32.mrb[0].mxu0
  %341 = vdwg.mxu0
  %v342 = vadd.f32 %v336, %v210
  %v343 = vadd.f32 %v338, %v214
  %v344 = vxor.u32 %v342, 2147483648
  %v345 = vmul.f32 %v344, 1.442695
  %v346 = vpow.pop %v345
  %v347 = vadd.f32 %v346, 1.0
  %v348 = vrcp.pop %v347
  %v349 = vmul.f32 1.0, %v348
  %351 = vrot.lane.b32.xlu0 %v343, 64
  %v352 = vpop.permute.xlu0 %351
  %v354 = vmul.f32 %v349, %v352
  %v355 = vadd.f32 %v343, %v354
  %v356 = vtanh.pop %v355
  %v357 = vsub.f32 1.0, %v349
  %359 = vrot.lane.b32.xlu0 %v356, 64
  %v360 = vpop.permute.xlu0 %359
  %v362 = vmul.f32 %v357, %v360
  %364 = vrot.lane.b32.xlu0 %v253, 64
  %v365 = vpop.permute.xlu0 %364
  %v367 = vmul.f32 %v349, %v365
  %v368 = vadd.f32 %v362, %v367
  %v369 = vpack.c.bf16 %v368, %v368
  %v370 = vld [vmem:[#allocation2 + $0x20] sm:$0xff]
  %v371 = vld [vmem:[#allocation2 + $0x28] sm:$0xff]
  %373 = vrot.lane.b32.xlu0 %v369, 64
  %v374 = vpop.permute.xlu0 %373
  %v376 = vsel %vm297, %v374, 0
  %378 = vmatprep.subr.bf16.mxu0 %v282
  %379 = vmatpush1.bf16.msra.mxu0 %v281
  %380 = vmatprep.subr.bf16.mxu0 %v284
  %381 = vmatpush1.bf16.msra.mxu0 %v283
  %382 = vmatprep.subr.bf16.mxu0 %v286
  %383 = vmatpush1.bf16.msra.mxu0 %v285
  %384 = vmatprep.subr.bf16.mxu0 %v288
  %385 = vmatpush1.bf16.msra.mxu0 %v287
  %386 = vmatprep.subr.bf16.mxu0 0
  %387 = vmatpush1.bf16.msra.mxu0 0
  %388 = vmatprep.subr.bf16.mxu0 0
  %389 = vmatpush1.bf16.msra.mxu0 0
  %390 = vmatprep.subr.bf16.mxu0 0
  %391 = vmatpush1.bf16.msra.mxu0 0
  %392 = vmatprep.subr.bf16.mxu0 0
  %393 = vmatpush1.bf16.msra.mxu0 0
  %394 = vmatprep.subr.bf16.mxu0 0
  %395 = vmatpush1.bf16.msra.mxu0 0
  %396 = vmatprep.subr.bf16.mxu0 0
  %397 = vmatpush1.bf16.msra.mxu0 0
  %398 = vmatprep.subr.bf16.mxu0 0
  %399 = vmatpush1.bf16.msra.mxu0 0
  %400 = vmatprep.subr.bf16.mxu0 0
  %401 = vmatpush1.bf16.msra.mxu0 0
  %402 = vmatprep.subr.bf16.mxu0 0
  %403 = vmatpush1.bf16.msra.mxu0 0
  %404 = vmatprep.subr.bf16.mxu0 0
  %405 = vmatpush1.bf16.msra.mxu0 0
  %406 = vmatprep.subr.bf16.mxu0 0
  %407 = vmatpush1.bf16.msra.mxu0 0
  %408 = vmatprep.subr.bf16.mxu0 0
  %409 = vmatpush1.bf16.msra.mxu0 0
  %410 = vmatprep.mubr.bf16.mxu0 0
  %411 = vmatmul.mubr.bf16.gmra.mrb[0].mxu0 %v376
  %v412 = vpop.f32.mrb[0].mxu0
  %v413 = vadd.f32 %v370, %v412
  %v414 = vpop.f32.mrb[0].mxu0
  %v415 = vadd.f32 %v371, %v414
  %v416 = vpop.f32.mrb[0].mxu0
  %v417 = vpop.f32.mrb[0].mxu0
  %418 = vdwg.mxu0
  %v419 = vadd.f32 %v413, %v210
  %v420 = vadd.f32 %v415, %v214
  %v421 = vxor.u32 %v419, 2147483648
  %v422 = vmul.f32 %v421, 1.442695
  %v423 = vpow.pop %v422
  %v424 = vadd.f32 %v423, 1.0
  %v425 = vrcp.pop %v424
  %v426 = vmul.f32 1.0, %v425
  %428 = vrot.lane.b32.xlu0 %v420, 64
  %v429 = vpop.permute.xlu0 %428
  %v431 = vmul.f32 %v426, %v429
  %v432 = vadd.f32 %v420, %v431
  %v433 = vtanh.pop %v432
  %v434 = vsub.f32 1.0, %v426
  %436 = vrot.lane.b32.xlu0 %v433, 64
  %v437 = vpop.permute.xlu0 %436
  %v439 = vmul.f32 %v434, %v437
  %v440 = vmul.f32 %v426, %v368
  %v441 = vadd.f32 %v439, %v440
  %v442 = vpack.c.bf16 %v441, %v441
  %v443 = vld [vmem:[#allocation2 + $0x30] sm:$0xff]
  %v444 = vld [vmem:[#allocation2 + $0x38] sm:$0xff]
  %446 = vrot.lane.b32.xlu0 %v442, 64
  %v447 = vpop.permute.xlu0 %446
  %v449 = vsel %vm297, %v447, 0
  %451 = vmatprep.subr.bf16.mxu0 %v282
  %452 = vmatpush1.bf16.msra.mxu0 %v281
  %453 = vmatprep.subr.bf16.mxu0 %v284
  %454 = vmatpush1.bf16.msra.mxu0 %v283
  %455 = vmatprep.subr.bf16.mxu0 %v286
  %456 = vmatpush1.bf16.msra.mxu0 %v285
  %457 = vmatprep.subr.bf16.mxu0 %v288
  %458 = vmatpush1.bf16.msra.mxu0 %v287
  %459 = vmatprep.subr.bf16.mxu0 0
  %460 = vmatpush1.bf16.msra.mxu0 0
  %461 = vmatprep.subr.bf16.mxu0 0
  %462 = vmatpush1.bf16.msra.mxu0 0
  %463 = vmatprep.subr.bf16.mxu0 0
  %464 = vmatpush1.bf16.msra.mxu0 0
  %465 = vmatprep.subr.bf16.mxu0 0
  %466 = vmatpush1.bf16.msra.mxu0 0
  %467 = vmatprep.subr.bf16.mxu0 0
  %468 = vmatpush1.bf16.msra.mxu0 0
  %469 = vmatprep.subr.bf16.mxu0 0
  %470 = vmatpush1.bf16.msra.mxu0 0
  %471 = vmatprep.subr.bf16.mxu0 0
  %472 = vmatpush1.bf16.msra.mxu0 0
  %473 = vmatprep.subr.bf16.mxu0 0
  %474 = vmatpush1.bf16.msra.mxu0 0
  %475 = vmatprep.subr.bf16.mxu0 0
  %476 = vmatpush1.bf16.msra.mxu0 0
  %477 = vmatprep.subr.bf16.mxu0 0
  %478 = vmatpush1.bf16.msra.mxu0 0
  %479 = vmatprep.subr.bf16.mxu0 0
  %480 = vmatpush1.bf16.msra.mxu0 0
  %481 = vmatprep.subr.bf16.mxu0 0
  %482 = vmatpush1.bf16.msra.mxu0 0
  %483 = vmatprep.mubr.bf16.mxu0 0
  %484 = vmatmul.mubr.bf16.gmra.mrb[0].mxu0 %v449
  %v485 = vpop.f32.mrb[0].mxu0
  %v486 = vadd.f32 %v443, %v485
  %v487 = vpop.f32.mrb[0].mxu0
  %v488 = vadd.f32 %v444, %v487
  %v489 = vpop.f32.mrb[0].mxu0
  %v490 = vpop.f32.mrb[0].mxu0
  %491 = vdwg.mxu0
  %v492 = vadd.f32 %v486, %v210
  %v493 = vadd.f32 %v488, %v214
  %v494 = vxor.u32 %v492, 2147483648
  %v495 = vmul.f32 %v494, 1.442695
  %v496 = vpow.pop %v495
  %v497 = vadd.f32 %v496, 1.0
  %v498 = vrcp.pop %v497
  %v499 = vmul.f32 1.0, %v498
  %501 = vrot.lane.b32.xlu0 %v493, 64
  %v502 = vpop.permute.xlu0 %501
  %v504 = vmul.f32 %v499, %v502
  %v505 = vadd.f32 %v493, %v504
  %v506 = vtanh.pop %v505
  %v507 = vsub.f32 1.0, %v499
  %509 = vrot.lane.b32.xlu0 %v506, 64
  %v510 = vpop.permute.xlu0 %509
  %v512 = vmul.f32 %v507, %v510
  %v513 = vmul.f32 %v499, %v441
  %v514 = vadd.f32 %v512, %v513
  %v515 = vpack.c.bf16 %v514, %v514
  %v516 = vld [vmem:[#allocation2 + $0x40] sm:$0xff]
  %v517 = vld [vmem:[#allocation2 + $0x48] sm:$0xff]
  %519 = vrot.lane.b32.xlu0 %v515, 64
  %v520 = vpop.permute.xlu0 %519
  %v522 = vsel %vm297, %v520, 0
  %524 = vmatprep.subr.bf16.mxu0 %v282
  %525 = vmatpush1.bf16.msra.mxu0 %v281
  %526 = vmatprep.subr.bf16.mxu0 %v284
  %527 = vmatpush1.bf16.msra.mxu0 %v283
  %528 = vmatprep.subr.bf16.mxu0 %v286
  %529 = vmatpush1.bf16.msra.mxu0 %v285
  %530 = vmatprep.subr.bf16.mxu0 %v288
  %531 = vmatpush1.bf16.msra.mxu0 %v287
  %532 = vmatprep.subr.bf16.mxu0 0
  %533 = vmatpush1.bf16.msra.mxu0 0
  %534 = vmatprep.subr.bf16.mxu0 0
  %535 = vmatpush1.bf16.msra.mxu0 0
  %536 = vmatprep.subr.bf16.mxu0 0
  %537 = vmatpush1.bf16.msra.mxu0 0
  %538 = vmatprep.subr.bf16.mxu0 0
  %539 = vmatpush1.bf16.msra.mxu0 0
  %540 = vmatprep.subr.bf16.mxu0 0
  %541 = vmatpush1.bf16.msra.mxu0 0
  %542 = vmatprep.subr.bf16.mxu0 0
  %543 = vmatpush1.bf16.msra.mxu0 0
  %544 = vmatprep.subr.bf16.mxu0 0
  %545 = vmatpush1.bf16.msra.mxu0 0
  %546 = vmatprep.subr.bf16.mxu0 0
  %547 = vmatpush1.bf16.msra.mxu0 0
  %548 = vmatprep.subr.bf16.mxu0 0
  %549 = vmatpush1.bf16.msra.mxu0 0
  %550 = vmatprep.subr.bf16.mxu0 0
  %551 = vmatpush1.bf16.msra.mxu0 0
  %552 = vmatprep.subr.bf16.mxu0 0
  %553 = vmatpush1.bf16.msra.mxu0 0
  %554 = vmatprep.subr.bf16.mxu0 0
  %555 = vmatpush1.bf16.msra.mxu0 0
  %556 = vmatprep.mubr.bf16.mxu0 0
  %557 = vmatmul.mubr.bf16.gmra.mrb[0].mxu0 %v522
  %v558 = vpop.f32.mrb[0].mxu0
  %v559 = vadd.f32 %v516, %v558
  %v560 = vpop.f32.mrb[0].mxu0
  %v561 = vadd.f32 %v517, %v560
  %v562 = vpop.f32.mrb[0].mxu0
  %v563 = vpop.f32.mrb[0].mxu0
  %564 = vdwg.mxu0
  %v565 = vadd.f32 %v559, %v210
  %v566 = vadd.f32 %v561, %v214
  %v567 = vxor.u32 %v565, 2147483648
  %v568 = vmul.f32 %v567, 1.442695
  %v569 = vpow.pop %v568
  %v570 = vadd.f32 %v569, 1.0
  %v571 = vrcp.pop %v570
  %v572 = vmul.f32 1.0, %v571
  %574 = vrot.lane.b32.xlu0 %v566, 64
  %v575 = vpop.permute.xlu0 %574
  %v577 = vmul.f32 %v572, %v575
  %v578 = vadd.f32 %v566, %v577
  %v579 = vtanh.pop %v578
  %v580 = vsub.f32 1.0, %v572
  %582 = vrot.lane.b32.xlu0 %v579, 64
  %v583 = vpop.permute.xlu0 %582
  %v585 = vmul.f32 %v580, %v583
  %v586 = vmul.f32 %v572, %v514
  %v587 = vadd.f32 %v585, %v586
  %v588 = vpack.c.bf16 %v587, %v587
  %v589 = vld [vmem:[#allocation2 + $0x50] sm:$0xff]
  %v590 = vld [vmem:[#allocation2 + $0x58] sm:$0xff]
  %592 = vrot.lane.b32.xlu0 %v588, 64
  %v593 = vpop.permute.xlu0 %592
  %v595 = vsel %vm297, %v593, 0
  %597 = vmatprep.subr.bf16.mxu0 %v282
  %598 = vmatpush1.bf16.msra.mxu0 %v281
  %599 = vmatprep.subr.bf16.mxu0 %v284
  %600 = vmatpush1.bf16.msra.mxu0 %v283
  %601 = vmatprep.subr.bf16.mxu0 %v286
  %602 = vmatpush1.bf16.msra.mxu0 %v285
  %603 = vmatprep.subr.bf16.mxu0 %v288
  %604 = vmatpush1.bf16.msra.mxu0 %v287
  %605 = vmatprep.subr.bf16.mxu0 0
  %606 = vmatpush1.bf16.msra.mxu0 0
  %607 = vmatprep.subr.bf16.mxu0 0
  %608 = vmatpush1.bf16.msra.mxu0 0
  %609 = vmatprep.subr.bf16.mxu0 0
  %610 = vmatpush1.bf16.msra.mxu0 0
  %611 = vmatprep.subr.bf16.mxu0 0
  %612 = vmatpush1.bf16.msra.mxu0 0
  %613 = vmatprep.subr.bf16.mxu0 0
  %614 = vmatpush1.bf16.msra.mxu0 0
  %615 = vmatprep.subr.bf16.mxu0 0
  %616 = vmatpush1.bf16.msra.mxu0 0
  %617 = vmatprep.subr.bf16.mxu0 0
  %618 = vmatpush1.bf16.msra.mxu0 0
  %619 = vmatprep.subr.bf16.mxu0 0
  %620 = vmatpush1.bf16.msra.mxu0 0
  %621 = vmatprep.subr.bf16.mxu0 0
  %622 = vmatpush1.bf16.msra.mxu0 0
  %623 = vmatprep.subr.bf16.mxu0 0
  %624 = vmatpush1.bf16.msra.mxu0 0
  %625 = vmatprep.subr.bf16.mxu0 0
  %626 = vmatpush1.bf16.msra.mxu0 0
  %627 = vmatprep.subr.bf16.mxu0 0
  %628 = vmatpush1.bf16.msra.mxu0 0
  %629 = vmatprep.mubr.bf16.mxu0 0
  %630 = vmatmul.mubr.bf16.gmra.mrb[0].mxu0 %v595
  %v631 = vpop.f32.mrb[0].mxu0
  %v632 = vadd.f32 %v589, %v631
  %v633 = vpop.f32.mrb[0].mxu0
  %v634 = vadd.f32 %v590, %v633
  %v635 = vpop.f32.mrb[0].mxu0
  %v636 = vpop.f32.mrb[0].mxu0
  %637 = vdwg.mxu0
  %v638 = vadd.f32 %v632, %v210
  %v639 = vadd.f32 %v634, %v214
  %v640 = vxor.u32 %v638, 2147483648
  %v641 = vmul.f32 %v640, 1.442695
  %v642 = vpow.pop %v641
  %v643 = vadd.f32 %v642, 1.0
  %v644 = vrcp.pop %v643
  %v645 = vmul.f32 1.0, %v644
  %647 = vrot.lane.b32.xlu0 %v639, 64
  %v648 = vpop.permute.xlu0 %647
  %v650 = vmul.f32 %v645, %v648
  %v651 = vadd.f32 %v639, %v650
  %v652 = vtanh.pop %v651
  %v653 = vsub.f32 1.0, %v645
  %655 = vrot.lane.b32.xlu0 %v652, 64
  %v656 = vpop.permute.xlu0 %655
  %v658 = vmul.f32 %v653, %v656
  %v659 = vmul.f32 %v645, %v587
  %v660 = vadd.f32 %v658, %v659
  %v661 = vpack.c.bf16 %v660, %v660
  %v662 = vld [vmem:[#allocation2 + $0x60] sm:$0xff]
  %v663 = vld [vmem:[#allocation2 + $0x68] sm:$0xff]
  %665 = vrot.lane.b32.xlu0 %v661, 64
  %v666 = vpop.permute.xlu0 %665
  %v668 = vsel %vm297, %v666, 0
  %670 = vmatprep.subr.bf16.mxu0 %v282
  %671 = vmatpush1.bf16.msra.mxu0 %v281
  %672 = vmatprep.subr.bf16.mxu0 %v284
  %673 = vmatpush1.bf16.msra.mxu0 %v283
  %674 = vmatprep.subr.bf16.mxu0 %v286
  %675 = vmatpush1.bf16.msra.mxu0 %v285
  %676 = vmatprep.subr.bf16.mxu0 %v288
  %677 = vmatpush1.bf16.msra.mxu0 %v287
  %678 = vmatprep.subr.bf16.mxu0 0
  %679 = vmatpush1.bf16.msra.mxu0 0
  %680 = vmatprep.subr.bf16.mxu0 0
  %681 = vmatpush1.bf16.msra.mxu0 0
  %682 = vmatprep.subr.bf16.mxu0 0
  %683 = vmatpush1.bf16.msra.mxu0 0
  %684 = vmatprep.subr.bf16.mxu0 0
  %685 = vmatpush1.bf16.msra.mxu0 0
  %686 = vmatprep.subr.bf16.mxu0 0
  %687 = vmatpush1.bf16.msra.mxu0 0
  %688 = vmatprep.subr.bf16.mxu0 0
  %689 = vmatpush1.bf16.msra.mxu0 0
  %690 = vmatprep.subr.bf16.mxu0 0
  %691 = vmatpush1.bf16.msra.mxu0 0
  %692 = vmatprep.subr.bf16.mxu0 0
  %693 = vmatpush1.bf16.msra.mxu0 0
  %694 = vmatprep.subr.bf16.mxu0 0
  %695 = vmatpush1.bf16.msra.mxu0 0
  %696 = vmatprep.subr.bf16.mxu0 0
  %697 = vmatpush1.bf16.msra.mxu0 0
  %698 = vmatprep.subr.bf16.mxu0 0
  %699 = vmatpush1.bf16.msra.mxu0 0
  %700 = vmatprep.subr.bf16.mxu0 0
  %701 = vmatpush1.bf16.msra.mxu0 0
  %702 = vmatprep.mubr.bf16.mxu0 0
  %703 = vmatmul.mubr.bf16.gmra.mrb[0].mxu0 %v668
  %v704 = vpop.f32.mrb[0].mxu0
  %v705 = vadd.f32 %v662, %v704
  %v706 = vpop.f32.mrb[0].mxu0
  %v707 = vadd.f32 %v663, %v706
  %v708 = vpop.f32.mrb[0].mxu0
  %v709 = vpop.f32.mrb[0].mxu0
  %710 = vdwg.mxu0
  %v711 = vadd.f32 %v705, %v210
  %v712 = vadd.f32 %v707, %v214
  %v713 = vxor.u32 %v711, 2147483648
  %v714 = vmul.f32 %v713, 1.442695
  %v715 = vpow.pop %v714
  %v716 = vadd.f32 %v715, 1.0
  %v717 = vrcp.pop %v716
  %v718 = vmul.f32 1.0, %v717
  %720 = vrot.lane.b32.xlu0 %v712, 64
  %v721 = vpop.permute.xlu0 %720
  %v723 = vmul.f32 %v718, %v721
  %v724 = vadd.f32 %v712, %v723
  %v725 = vtanh.pop %v724
  %v726 = vsub.f32 1.0, %v718
  %728 = vrot.lane.b32.xlu0 %v725, 64
  %v729 = vpop.permute.xlu0 %728
  %v731 = vmul.f32 %v726, %v729
  %v732 = vmul.f32 %v718, %v660
  %v733 = vadd.f32 %v731, %v732
  %v734 = vpack.c.bf16 %v733, %v733
  %v735 = vld [vmem:[#allocation2 + $0x70] sm:$0xff]
  %v736 = vld [vmem:[#allocation2 + $0x78] sm:$0xff]
  %738 = vrot.lane.b32.xlu0 %v734, 64
  %v739 = vpop.permute.xlu0 %738
  %v741 = vsel %vm297, %v739, 0
  %743 = vmatprep.subr.bf16.mxu0 %v282
  %744 = vmatpush1.bf16.msra.mxu0 %v281
  %745 = vmatprep.subr.bf16.mxu0 %v284
  %746 = vmatpush1.bf16.msra.mxu0 %v283
  %747 = vmatprep.subr.bf16.mxu0 %v286
  %748 = vmatpush1.bf16.msra.mxu0 %v285
  %749 = vmatprep.subr.bf16.mxu0 %v288
  %750 = vmatpush1.bf16.msra.mxu0 %v287
  %751 = vmatprep.subr.bf16.mxu0 0
  %752 = vmatpush1.bf16.msra.mxu0 0
  %753 = vmatprep.subr.bf16.mxu0 0
  %754 = vmatpush1.bf16.msra.mxu0 0
  %755 = vmatprep.subr.bf16.mxu0 0
  %756 = vmatpush1.bf16.msra.mxu0 0
  %757 = vmatprep.subr.bf16.mxu0 0
  %758 = vmatpush1.bf16.msra.mxu0 0
  %759 = vmatprep.subr.bf16.mxu0 0
  %760 = vmatpush1.bf16.msra.mxu0 0
  %761 = vmatprep.subr.bf16.mxu0 0
  %762 = vmatpush1.bf16.msra.mxu0 0
  %763 = vmatprep.subr.bf16.mxu0 0
  %764 = vmatpush1.bf16.msra.mxu0 0
  %765 = vmatprep.subr.bf16.mxu0 0
  %766 = vmatpush1.bf16.msra.mxu0 0
  %767 = vmatprep.subr.bf16.mxu0 0
  %768 = vmatpush1.bf16.msra.mxu0 0
  %769 = vmatprep.subr.bf16.mxu0 0
  %770 = vmatpush1.bf16.msra.mxu0 0
  %771 = vmatprep.subr.bf16.mxu0 0
  %772 = vmatpush1.bf16.msra.mxu0 0
  %773 = vmatprep.subr.bf16.mxu0 0
  %774 = vmatpush1.bf16.msra.mxu0 0
  %775 = vmatprep.mubr.bf16.mxu0 0
  %776 = vmatmul.mubr.bf16.gmra.mrb[0].mxu0 %v741
  %v777 = vpop.f32.mrb[0].mxu0
  %v778 = vadd.f32 %v735, %v777
  %v779 = vpop.f32.mrb[0].mxu0
  %v780 = vadd.f32 %v736, %v779
  %v781 = vpop.f32.mrb[0].mxu0
  %v782 = vpop.f32.mrb[0].mxu0
  %783 = vdwg.mxu0
  %v784 = vadd.f32 %v778, %v210
  %v785 = vadd.f32 %v780, %v214
  %v786 = vxor.u32 %v784, 2147483648
  %v787 = vmul.f32 %v786, 1.442695
  %v788 = vpow.pop %v787
  %v789 = vadd.f32 %v788, 1.0
  %v790 = vrcp.pop %v789
  %v791 = vmul.f32 1.0, %v790
  %793 = vrot.lane.b32.xlu0 %v785, 64
  %v794 = vpop.permute.xlu0 %793
  %v796 = vmul.f32 %v791, %v794
  %v797 = vadd.f32 %v785, %v796
  %v798 = vtanh.pop %v797
  %v799 = vsub.f32 1.0, %v791
  %801 = vrot.lane.b32.xlu0 %v798, 64
  %v802 = vpop.permute.xlu0 %801
  %v804 = vmul.f32 %v799, %v802
  %v805 = vmul.f32 %v791, %v733
  %v806 = vadd.f32 %v804, %v805
  %v807 = vpack.c.bf16 %v806, %v806
  %v808 = vld [vmem:[#allocation2 + $0x80] sm:$0xff]
  %v809 = vld [vmem:[#allocation2 + $0x88] sm:$0xff]
  %811 = vrot.lane.b32.xlu0 %v807, 64
  %v812 = vpop.permute.xlu0 %811
  %v814 = vsel %vm297, %v812, 0
  %816 = vmatprep.subr.bf16.mxu0 %v282
  %817 = vmatpush1.bf16.msra.mxu0 %v281
  %818 = vmatprep.subr.bf16.mxu0 %v284
  %819 = vmatpush1.bf16.msra.mxu0 %v283
  %820 = vmatprep.subr.bf16.mxu0 %v286
  %821 = vmatpush1.bf16.msra.mxu0 %v285
  %822 = vmatprep.subr.bf16.mxu0 %v288
  %823 = vmatpush1.bf16.msra.mxu0 %v287
  %824 = vmatprep.subr.bf16.mxu0 0
  %825 = vmatpush1.bf16.msra.mxu0 0
  %826 = vmatprep.subr.bf16.mxu0 0
  %827 = vmatpush1.bf16.msra.mxu0 0
  %828 = vmatprep.subr.bf16.mxu0 0
  %829 = vmatpush1.bf16.msra.mxu0 0
  %830 = vmatprep.subr.bf16.mxu0 0
  %831 = vmatpush1.bf16.msra.mxu0 0
  %832 = vmatprep.subr.bf16.mxu0 0
  %833 = vmatpush1.bf16.msra.mxu0 0
  %834 = vmatprep.subr.bf16.mxu0 0
  %835 = vmatpush1.bf16.msra.mxu0 0
  %836 = vmatprep.subr.bf16.mxu0 0
  %837 = vmatpush1.bf16.msra.mxu0 0
  %838 = vmatprep.subr.bf16.mxu0 0
  %839 = vmatpush1.bf16.msra.mxu0 0
  %840 = vmatprep.subr.bf16.mxu0 0
  %841 = vmatpush1.bf16.msra.mxu0 0
  %842 = vmatprep.subr.bf16.mxu0 0
  %843 = vmatpush1.bf16.msra.mxu0 0
  %844 = vmatprep.subr.bf16.mxu0 0
  %845 = vmatpush1.bf16.msra.mxu0 0
  %846 = vmatprep.subr.bf16.mxu0 0
  %847 = vmatpush1.bf16.msra.mxu0 0
  %848 = vmatprep.mubr.bf16.mxu0 0
  %849 = vmatmul.mubr.bf16.gmra.mrb[0].mxu0 %v814
  %v850 = vpop.f32.mrb[0].mxu0
  %v851 = vadd.f32 %v808, %v850
  %v852 = vpop.f32.mrb[0].mxu0
  %v853 = vadd.f32 %v809, %v852
  %v854 = vpop.f32.mrb[0].mxu0
  %v855 = vpop.f32.mrb[0].mxu0
  %856 = vdwg.mxu0
  %v857 = vadd.f32 %v851, %v210
  %v858 = vadd.f32 %v853, %v214
  %v859 = vxor.u32 %v857, 2147483648
  %v860 = vmul.f32 %v859, 1.442695
  %v861 = vpow.pop %v860
  %v862 = vadd.f32 %v861, 1.0
  %v863 = vrcp.pop %v862
  %v864 = vmul.f32 1.0, %v863
  %866 = vrot.lane.b32.xlu0 %v858, 64
  %v867 = vpop.permute.xlu0 %866
  %v869 = vmul.f32 %v864, %v867
  %v870 = vadd.f32 %v858, %v869
  %v871 = vtanh.pop %v870
  %v872 = vsub.f32 1.0, %v864
  %874 = vrot.lane.b32.xlu0 %v871, 64
  %v875 = vpop.permute.xlu0 %874
  %v877 = vmul.f32 %v872, %v875
  %v878 = vmul.f32 %v864, %v806
  %v879 = vadd.f32 %v877, %v878
  %v880 = vld [vmem:[%s4] sm:$0x1]
  %v882 = vlaneseq
  %v883 = vshrl.u32 %v882, 7
  %v884 = vsub.s32 0, %v883
  %v885 = vrot.slane %v880, %v884
  %886 = vrot.lane.b32.xlu0 %v885, 96
  %v887 = vpop.permute.xlu0 %886
  %v889 = vmul.f32 %v879, %v887
  %891 = vrot.lane.b32.xlu0 %v889, 32
  %v892 = vpop.permute.xlu0 %891
  %v894 = vsel %vm252, %v892, 0.0
  %895 = vadd.xlane.f32.xlu0 %v894
  %v896 = vpop.xlane.xlu0 %895
  %v897 = vld [vmem:[#allocation3] sm:$0x1]
  %v899 = vlaneseq
  %v900 = vshrl.u32 %v899, 7
  %v901 = vsub.s32 0, %v900
  %v902 = vrot.slane %v897, %v901
  %v904 = vadd.f32 %v896, %v902
  %906 = vset.pattern.permute.xlu0 0
  %907 = vperm.xlu0 %906, %v904
  %v908 = vpop.permute.xlu0 %907
  %910 = vst [vmem:[%s6] sm:$0xff] %v908
  // Predicated region
  $region26: #{gru_regressor_forward.1} parent=0 // pred_check
    _
  $region27: #{gru_regressor_forward.1} parent=0 // pred_check_branch
    %912 = sbr.rel (0) target = $region29
  $region28: #{gru_regressor_forward.1} parent=0 // pred_region
    _
  $region29: #{gru_regressor_forward.1} parent=0 // pred_fallthru
    _
  // Predicated region
  $region30: #{gru_regressor_forward.1} parent=0 // pred_check
    _
  $region31: #{gru_regressor_forward.1} parent=0 // pred_check_branch
    %914 = sbr.rel (0) target = $region33
  $region32: #{gru_regressor_forward.1} parent=0 // pred_region
    _
  $region33: #{gru_regressor_forward.1} parent=0 // pred_fallthru
    _

</llo_original>
